<compile_context>
chip_gen: v7x
topology: tpu7x:2x2x1
jax: 0.10.0
libtpu: 0.0.40
codegen_flags: <defaults>
</compile_context>

<pallas_src>
import functools
import math

import numpy as np

import jax
import jax.numpy as jnp
from jax.experimental import pallas as pl
from jax.experimental.pallas import tpu as pltpu


_KRON_WEIGHT_LIMIT_BYTES = 8 * 1024 * 1024   # use kron path while weight fits VMEM
_BLOCK_VMEM_BUDGET_BYTES = 8 * 1024 * 1024   # double-buffered in+out plane blocks


def _interp_matrix_np(in_size: int, out_size: int) -> np.ndarray:
    """(out_size, in_size) bilinear weights, align_corners=True.

    Source-index math in float64 to match PyTorch's double-precision index
    computation (avoids off-by-one weight splits at exact boundaries).
    """
    if out_size == 1:
        src = np.zeros((1,), np.float64)
    else:
        scale = (in_size - 1) / (out_size - 1)
        src = np.arange(out_size, dtype=np.float64) * scale
    i0 = np.clip(np.floor(src).astype(np.int64), 0, in_size - 1)
    i1 = np.clip(i0 + 1, 0, in_size - 1)
    frac = src - i0
    w = np.zeros((out_size, in_size), np.float64)
    rows = np.arange(out_size)
    np.add.at(w, (rows, i0), 1.0 - frac)
    np.add.at(w, (rows, i1), frac)
    return w.astype(np.float32)


def _choose_block_b(b: int, per_plane_vmem_bytes: int,
                    budget_bytes: int = _BLOCK_VMEM_BUDGET_BYTES) -> int:
    """Planes per grid step: as many as fit the VMEM budget, multiple of 8
    unless it covers the whole batch; split >=2 steps when batch is big enough
    so both v7x TensorCores get work."""
    cap = max(8, (budget_bytes // max(per_plane_vmem_bytes, 1)) // 8 * 8)
    if b > cap:
        return cap                      # grid >= 2; partial last block is safe
    if b >= 16:
        half = -(-b // 2)
        return min(cap, ((half + 7) // 8) * 8)
    return b                            # whole (small) batch in one step


# ---------------------------------------------------------------------------
# Kernels
# ---------------------------------------------------------------------------

def _kron_kernel(xr_ref, xi_ref, w_ref, or_ref, oi_ref):
    # xr/xi: (TB, H*W) planes; w: (H*W, H_out*W_out); out: (TB, H_out*W_out).
    # One lane-dense MXU matmul per component, no transposes.
    w = w_ref[...]
    or_ref[...] = jnp.dot(xr_ref[...], w, preferred_element_type=jnp.float32)
    oi_ref[...] = jnp.dot(xi_ref[...], w, preferred_element_type=jnp.float32)


def _separable_kernel(xr_ref, xi_ref, wh_ref, wwt_ref, or_ref, oi_ref):
    # xr/xi: (TB, H, W); wh: (H_out, H); wwt: (W, W_out) pre-transposed on the
    # host (no in-kernel .T); out: (TB, H_out, W_out).
    wh = wh_ref[...]
    wwt = wwt_ref[...]
    tb = xr_ref.shape[0]

    def body(i, carry):
        for x_ref, o_ref in ((xr_ref, or_ref), (xi_ref, oi_ref)):
            t = jnp.dot(wh, x_ref[i], preferred_element_type=jnp.float32)
            o_ref[i] = jnp.dot(t, wwt, preferred_element_type=jnp.float32)
        return carry

    # Unroll short plane loops so the LLO scheduler can interleave the
    # per-plane MXU pushes; keep rolled when TB is large to bound code size.
    jax.lax.fori_loop(0, tb, body, 0, unroll=(tb <= 8))


# ---------------------------------------------------------------------------
# pallas_call wrappers
# ---------------------------------------------------------------------------

def _upsample_kron(xr, xi, H_out, W_out):
    B, H, W = xr.shape
    HW, HWo = H * W, H_out * W_out

    wh = _interp_matrix_np(H, H_out)                  # (H_out, H)
    ww = _interp_matrix_np(W, W_out)                  # (W_out, W)
    # Transposed Kronecker weight so the kernel is a plain row-major matmul:
    #   wk_t[h*W + w, oh*W_out + ow] = wh[oh, h] * ww[ow, w]
    wk_t = np.einsum("oh,pw->hwop", wh, ww).reshape(HW, HWo)

    TB = _choose_block_b(B, 16 * (HW + HWo))
    grid = (pl.cdiv(B, TB),)

    flops = 2 * 2 * B * HW * HWo                      # real + imag matmuls
    bytes_accessed = 4 * (2 * B * (HW + HWo) + HW * HWo)

    out_r, out_i = pl.pallas_call(
        _kron_kernel,
        out_shape=(jax.ShapeDtypeStruct((B, HWo), jnp.float32),
                   jax.ShapeDtypeStruct((B, HWo), jnp.float32)),
        grid_spec=pltpu.PrefetchScalarGridSpec(
            num_scalar_prefetch=0,
            grid=grid,
            in_specs=[
                pl.BlockSpec((TB, HW), lambda b: (b, 0)),
                pl.BlockSpec((TB, HW), lambda b: (b, 0)),
                pl.BlockSpec((HW, HWo), lambda b: (0, 0)),
            ],
            out_specs=[
                pl.BlockSpec((TB, HWo), lambda b: (b, 0)),
                pl.BlockSpec((TB, HWo), lambda b: (b, 0)),
            ]),
        compiler_params=pltpu.CompilerParams(
            dimension_semantics=("parallel",)),
        cost_estimate=pl.CostEstimate(
            flops=flops, transcendentals=0, bytes_accessed=bytes_accessed),
    )(xr.reshape(B, HW), xi.reshape(B, HW), jnp.asarray(wk_t))

    return out_r.reshape(B, H_out, W_out), out_i.reshape(B, H_out, W_out)


def _upsample_separable(xr, xi, H_out, W_out):
    B, H, W = xr.shape
    wh = _interp_matrix_np(H, H_out)                                    # (H_out, H)
    wwt = np.ascontiguousarray(_interp_matrix_np(W, W_out).T)           # (W, W_out)

    TB = _choose_block_b(B, 16 * (H * W + H_out * W_out))
    grid = (pl.cdiv(B, TB),)

    flops = 2 * 2 * B * (H_out * H * W + H_out * W * W_out)
    bytes_accessed = 4 * (2 * B * (H * W + H_out * W_out) + H_out * H + W * W_out)

    return pl.pallas_call(
        _separable_kernel,
        out_shape=(jax.ShapeDtypeStruct((B, H_out, W_out), jnp.float32),
                   jax.ShapeDtypeStruct((B, H_out, W_out), jnp.float32)),
        grid_spec=pltpu.PrefetchScalarGridSpec(
            num_scalar_prefetch=0,
            grid=grid,
            in_specs=[
                pl.BlockSpec((TB, H, W), lambda b: (b, 0, 0)),
                pl.BlockSpec((TB, H, W), lambda b: (b, 0, 0)),
                pl.BlockSpec((H_out, H), lambda b: (0, 0)),
                pl.BlockSpec((W, W_out), lambda b: (0, 0)),
            ],
            out_specs=[
                pl.BlockSpec((TB, H_out, W_out), lambda b: (b, 0, 0)),
                pl.BlockSpec((TB, H_out, W_out), lambda b: (b, 0, 0)),
            ]),
        compiler_params=pltpu.CompilerParams(
            dimension_semantics=("parallel",)),
        cost_estimate=pl.CostEstimate(
            flops=flops, transcendentals=0, bytes_accessed=bytes_accessed),
    )(xr, xi, jnp.asarray(wh), jnp.asarray(wwt))


def _resolve_out_size(H, W, size, scale_factor):
    if size is not None:
        if isinstance(size, int):
            return size, size
        return int(size[0]), int(size[1])
    assert scale_factor is not None, "need size or scale_factor"
    if isinstance(scale_factor, (tuple, list)):
        sh, sw = float(scale_factor[0]), float(scale_factor[1])
    else:
        sh = sw = float(scale_factor)
    return int(math.floor(H * sh)), int(math.floor(W * sw))


@functools.partial(jax.jit, static_argnames=("size", "scale_factor"))
def complex_upsampling_bilinear2d(x, size=None, scale_factor=None):
    """Pallas implementation of ComplexUpSamplingBilinear2d.forward.

    x: complex array of shape (N, C, H, W).  Returns complex64 of shape
    (N, C, H_out, W_out) matching F.interpolate(mode='bilinear',
    align_corners=True) applied to real and imag parts.
    """
    assert jnp.issubdtype(x.dtype, jnp.complexfloating)
    N, C, H, W = x.shape
    H_out, W_out = _resolve_out_size(H, W, size, scale_factor)

    B = N * C
    # Real / imag passed as two separate plane stacks: no full-tensor
    # stack+reshape copy in front of the pallas_call.
    xr = jnp.real(x).astype(jnp.float32).reshape(B, H, W)
    xi = jnp.imag(x).astype(jnp.float32).reshape(B, H, W)

    if H * W * H_out * W_out * 4 <= _KRON_WEIGHT_LIMIT_BYTES:
        out_r, out_i = _upsample_kron(xr, xi, H_out, W_out)
    else:
        out_r, out_i = _upsample_separable(xr, xi, H_out, W_out)

    # TODO(synk): Pallas/TPU VMEM has no complex dtype, so the complex
    # recombine stays outside the kernel (one extra read+write of the output).
    out = jax.lax.complex(out_r, out_i).astype(jnp.complex64)
    return out.reshape(N, C, H_out, W_out)


if __name__ == "__main__":
    key = jax.random.PRNGKey(0)
    kr, ki = jax.random.split(key)

    def _reference(x, H_out, W_out):
        _, _, H, W = x.shape
        wh = jnp.asarray(_interp_matrix_np(H, H_out))
        ww = jnp.asarray(_interp_matrix_np(W, W_out))
        ref_r = jnp.einsum("oh,nchw,pw->ncop", wh, jnp.real(x), ww)
        ref_i = jnp.einsum("oh,nchw,pw->ncop", wh, jnp.imag(x), ww)
        return (ref_r + 1j * ref_i).astype(jnp.complex64)

    # --- small spatial size: lane-dense kron path (module config scale=2) ---
    N, C, H, W = 2, 4, 16, 16
    x = (jax.random.normal(kr, (N, C, H, W), jnp.float32)
         + 1j * jax.random.normal(ki, (N, C, H, W), jnp.float32)
         ).astype(jnp.complex64)
    out = complex_upsampling_bilinear2d(x, scale_factor=2)     # -> (2,4,32,32)
    jax.block_until_ready(out)
    assert out.shape == (N, C, 32, 32) and out.dtype == jnp.complex64
    ref = _reference(x, 32, 32)
    assert jnp.allclose(out, ref, atol=1e-4, rtol=1e-4)

    # --- larger spatial size: batched separable fallback path ---
    N2, C2, H2, W2 = 2, 4, 32, 32
    kr2, ki2 = jax.random.split(jax.random.PRNGKey(0))
    x2 = (jax.random.normal(kr2, (N2, C2, H2, W2), jnp.float32)
          + 1j * jax.random.normal(ki2, (N2, C2, H2, W2), jnp.float32)
          ).astype(jnp.complex64)
    out2 = complex_upsampling_bilinear2d(x2, size=(64, 64))
    jax.block_until_ready(out2)
    assert out2.shape == (N2, C2, 64, 64) and out2.dtype == jnp.complex64
    ref2 = _reference(x2, 64, 64)
    assert jnp.allclose(out2, ref2, atol=1e-4, rtol=1e-4)

    print("KERNEL_OK")
</pallas_src>

<mosaic_0001>
module attributes {stable_mosaic.version = 11 : i64} {
  func.func @_kron_kernel(%arg0: i32, %arg1: memref<8x256xf32, #tpu.memory_space<vmem>>, %arg2: memref<8x256xf32, #tpu.memory_space<vmem>>, %arg3: memref<256x1024xf32, #tpu.memory_space<vmem>>, %arg4: memref<8x1024xf32, #tpu.memory_space<vmem>>, %arg5: memref<8x1024xf32, #tpu.memory_space<vmem>>) attributes {dimension_semantics = [#tpu.dimension_semantics<parallel>], iteration_bounds = array<i64: 1>, scalar_prefetch = 0 : i64, scratch_operands = 0 : i64, tpu.core_type = #tpu.core_type<tc>, window_params = [{transform_indices = @transform_0, window_bounds = array<i64: 8, 256>}, {transform_indices = @transform_1, window_bounds = array<i64: 8, 256>}, {pipeline_mode = #tpu.pipeline_mode<synchronous>, transform_indices = @transform_2, window_bounds = array<i64: 256, 1024>}, {transform_indices = @transform_3, window_bounds = array<i64: 8, 1024>}, {transform_indices = @transform_4, window_bounds = array<i64: 8, 1024>}]} {
    %c0 = arith.constant 0 : index
    %c0_0 = arith.constant 0 : index
    %0 = vector.load %arg3[%c0, %c0_0] : memref<256x1024xf32, #tpu.memory_space<vmem>>, vector<256x1024xf32>
    %c0_1 = arith.constant 0 : index
    %c0_2 = arith.constant 0 : index
    %1 = vector.load %arg1[%c0_1, %c0_2] : memref<8x256xf32, #tpu.memory_space<vmem>>, vector<8x256xf32>
    %cst = arith.constant dense<0.000000e+00> : vector<8x1024xf32>
    %2 = tpu.matmul %1, %0, %cst {dimension_numbers = #tpu.dot_dimension_numbers<[1], [0], [0], [1], [0, 0, 1, 1], [], []>} : vector<8x256xf32>, vector<256x1024xf32>, vector<8x1024xf32> -> vector<8x1024xf32>
    %c0_3 = arith.constant 0 : index
    %c0_4 = arith.constant 0 : index
    %3 = vector.load %arg4[%c0_3, %c0_4] : memref<8x1024xf32, #tpu.memory_space<vmem>>, vector<8x1024xf32>
    tpu.vector_store %arg4[%c0_3, %c0_4], %2 {strides = array<i32>} : memref<8x1024xf32, #tpu.memory_space<vmem>>, vector<8x1024xf32>,
    %c0_5 = arith.constant 0 : index
    %c0_6 = arith.constant 0 : index
    %4 = vector.load %arg2[%c0_5, %c0_6] : memref<8x256xf32, #tpu.memory_space<vmem>>, vector<8x256xf32>
    %cst_7 = arith.constant dense<0.000000e+00> : vector<8x1024xf32>
    %5 = tpu.matmul %4, %0, %cst_7 {dimension_numbers = #tpu.dot_dimension_numbers<[1], [0], [0], [1], [0, 0, 1, 1], [], []>} : vector<8x256xf32>, vector<256x1024xf32>, vector<8x1024xf32> -> vector<8x1024xf32>
    %c0_8 = arith.constant 0 : index
    %c0_9 = arith.constant 0 : index
    %6 = vector.load %arg5[%c0_8, %c0_9] : memref<8x1024xf32, #tpu.memory_space<vmem>>, vector<8x1024xf32>
    tpu.vector_store %arg5[%c0_8, %c0_9], %5 {strides = array<i32>} : memref<8x1024xf32, #tpu.memory_space<vmem>>, vector<8x1024xf32>,
    return
  }
  func.func @transform_0(%arg0: i32) -> (i32, i32) {
    %c0_i32 = arith.constant 0 : i32
    %c0_i32_0 = arith.constant 0 : i32
    return %arg0, %c0_i32 : i32, i32
  }
  func.func @transform_1(%arg0: i32) -> (i32, i32) {
    %c0_i32 = arith.constant 0 : i32
    %c0_i32_0 = arith.constant 0 : i32
    return %arg0, %c0_i32 : i32, i32
  }
  func.func @transform_2(%arg0: i32) -> (i32, i32) {
    %c0_i32 = arith.constant 0 : i32
    %c0_i32_0 = arith.constant 0 : i32
    %c0_i32_1 = arith.constant 0 : i32
    return %c0_i32, %c0_i32_0 : i32, i32
  }
  func.func @transform_3(%arg0: i32) -> (i32, i32) {
    %c0_i32 = arith.constant 0 : i32
    %c0_i32_0 = arith.constant 0 : i32
    return %arg0, %c0_i32 : i32, i32
  }
  func.func @transform_4(%arg0: i32) -> (i32, i32) {
    %c0_i32 = arith.constant 0 : i32
    %c0_i32_0 = arith.constant 0 : i32
    return %arg0, %c0_i32 : i32, i32
  }
}

</mosaic_0001>

<llo_original>
// kernel: custom-call
$region0: #{custom-call}
  %s0 = inlined_call_operand.hbm [shape: c64[2,4,16,16], index: 0, kind: input, shape index: {}]
  %s1 = inlined_call_operand.vmem [shape: f32[2,4,16,16], index: 1, kind: output, shape index: {}]
  $region1: #{custom-call} parent=0
    #allocation0 [shape = 's32[1]{0}', space=sflag, size = 0x4, scoped, tag = 'scoped memory for custom-call']
    %2 = vsyncpa [#allocation0], 0
    %s3 = sshll.u32 %s1, 4
    %s4 = int_to_ptr.vmem [resolvable:$true] %s3
    %6 = dma.hbm_to_vmem [thread:$0]  %s0, 2048, %s4, [#allocation0]
    %7 = dma.done [#allocation0], 2048
    %8 = vsyncpa [#allocation0], 1

// kernel: custom-call.1
$region0: #{custom-call.1}
  %s0 = inlined_call_operand.hbm [shape: c64[2,4,16,16], index: 0, kind: input, shape index: {}]
  %s1 = inlined_call_operand.vmem [shape: f32[2,4,16,16], index: 1, kind: output, shape index: {}]
  %s2 = scalar_lea.hbm %s0, 2048
  $region1: #{custom-call.1} parent=0
    #allocation0 [shape = 's32[1]{0}', space=sflag, size = 0x4, scoped, tag = 'scoped memory for custom-call.1']
    %3 = vsyncpa [#allocation0], 0
    %s4 = sshll.u32 %s1, 4
    %s5 = int_to_ptr.vmem [resolvable:$true] %s4
    %7 = dma.hbm_to_vmem [thread:$0]  %s2, 2048, %s5, [#allocation0]
    %8 = dma.done [#allocation0], 2048
    %9 = vsyncpa [#allocation0], 1

// kernel: custom-call.2
$region0: #{custom-call.2}
  %s0 = inlined_call_operand.vmem [shape: f32[2,4,32,32], index: 0, kind: input, shape index: {}]
  %s1 = inlined_call_operand.vmem [shape: f32[2,4,32,32], index: 1, kind: input, shape index: {}]
  %s2 = inlined_call_operand.hbm [shape: c64[2,4,32,32], index: 2, kind: output, shape index: {}]
  %s3 = scalar_lea.hbm %s2, 4096
  $region1: #{custom-call.2} parent=0
    #allocation0 [shape = 's32[1]{0}', space=sflag, size = 0x4, scoped, tag = 'scoped memory for custom-call.2']
    %4 = vsyncpa [#allocation0], 0
    %s5 = sshll.u32 %s0, 4
    %s6 = int_to_ptr.vmem [resolvable:$true] %s5
    %8 = dma.vmem_to_hbm [thread:$0]  %s6, 4096, %s2, [#allocation0]
    %9 = dma.done [#allocation0], 4096
    %10 = vsyncpa [#allocation0], 1
  $region2: #{custom-call.2} parent=0
    #allocation1 [shape = 's32[1]{0}', space=sflag, size = 0x4, scoped, tag = 'scoped memory for custom-call.2']
    %11 = vsyncpa [#allocation1], 0
    %s12 = sshll.u32 %s1, 4
    %s13 = int_to_ptr.vmem [resolvable:$true] %s12
    %15 = dma.vmem_to_hbm [thread:$0]  %s13, 4096, %s3, [#allocation1]
    %16 = dma.done [#allocation1], 4096
    %17 = vsyncpa [#allocation1], 1

// kernel: complex_upsampling_bilinear2d.1
$region0: #{complex_upsampling_bilinear2d.1}
  #allocation0 [shape = 'u32[]', space=smem, size = 0x4, offset = 0x4, fixed_abs, tag = 'smem constant byte address 0x4 - core index']
  #allocation1 [shape = 'u32[144,128]{1,0:T(1,128)}', space=vmem, size = 0x12000, scoped, tag = 'internal scratch']
  %s0 = inlined_call_operand.vmem [shape: f32[8,256], index: 0, kind: input, shape index: {}]
  %s1 = inlined_call_operand.vmem [shape: f32[8,256], index: 1, kind: input, shape index: {}]
  %s2 = inlined_call_operand.hbm [shape: f32[256,1024], index: 2, kind: input, shape index: {}]
  %s3 = inlined_call_operand.vmem [shape: f32[8,1024], index: 3, kind: output, shape index: {0}]
  %s4 = inlined_call_operand.vmem [shape: f32[8,1024], index: 4, kind: output, shape index: {1}]
  %5 = xla_tuple %s3, %s4
  %s6 = sld [smem:[#allocation0]]
  $region34: #{complex_upsampling_bilinear2d.1} parent=0
    _
  %s8 = ssub.s32 1, %s6
  %s9 = scalar_select 0, %s8, %s6
  $region1: #{complex_upsampling_bilinear2d.1} parent=0
    #allocation2 [shape = 'u8[1048576]{0}', space=vmem, size = 0x100000, scoped, tag = 'input window, operand 2, single buffered']
    #allocation3 [shape = 's32[1]{0}', space=sflag, size = 0x4, scoped, tag = 'scoped memory for complex_upsampling_bilinear2d.1']
    %10 = vsyncpa [#allocation3], 0
    // Predicated region
    $region2: #{complex_upsampling_bilinear2d.1} parent=1 // pred_check
      _
    $region3: #{complex_upsampling_bilinear2d.1} parent=1 // pred_check_branch
      %12 = sbr.rel (0) target = $region5
    $region4: #{complex_upsampling_bilinear2d.1} parent=1 // pred_region
      _
    $region5: #{complex_upsampling_bilinear2d.1} parent=1 // pred_fallthru
      _
    // Predicated region
    $region6: #{complex_upsampling_bilinear2d.1} parent=1 // pred_check
      _
    $region7: #{complex_upsampling_bilinear2d.1} parent=1 // pred_check_branch
      %14 = sbr.rel (0) target = $region9
    $region8: #{complex_upsampling_bilinear2d.1} parent=1 // pred_region
      _
    $region9: #{complex_upsampling_bilinear2d.1} parent=1 // pred_fallthru
      _
    // Predicated region
    $region10: #{complex_upsampling_bilinear2d.1} parent=1 // pred_check
      _
    $region11: #{complex_upsampling_bilinear2d.1} parent=1 // pred_check_branch
      %16 = sbr.rel (0) target = $region13
    $region12: #{complex_upsampling_bilinear2d.1} parent=1 // pred_region
      %s18 = ssub.s32 32768, 32768
      %19 = vsyncadd [#allocation3], %s18
      %s20 = sshll.u32 [#allocation2], 4
      %s21 = int_to_ptr.vmem [resolvable:$true] %s20
      %26 = dma.hbm_to_vmem [thread:$0]  %s2, 32768, %s21, [#allocation3], 1024, 1024, 64
    $region13: #{complex_upsampling_bilinear2d.1} parent=1 // pred_fallthru
      _
    // Predicated region
    $region14: #{complex_upsampling_bilinear2d.1} parent=1 // pred_check
      _
    $region15: #{complex_upsampling_bilinear2d.1} parent=1 // pred_check_branch
      %28 = sbr.rel (0) target = $region17
    $region16: #{complex_upsampling_bilinear2d.1} parent=1 // pred_region
      %29 = dma.done [#allocation3], 32768
    $region17: #{complex_upsampling_bilinear2d.1} parent=1 // pred_fallthru
      _
    %v30 = vld [vmem:[#allocation2] sm:$0xff]
    %v31 = vld [vmem:[#allocation2 + $0x8] sm:$0xff]
    %v32 = vld [vmem:[#allocation2 + $0x10] sm:$0xff]
    %v33 = vld [vmem:[#allocation2 + $0x18] sm:$0xff]
    %v34 = vld [vmem:[#allocation2 + $0x20] sm:$0xff]
    %v35 = vld [vmem:[#allocation2 + $0x28] sm:$0xff]
    %v36 = vld [vmem:[#allocation2 + $0x30] sm:$0xff]
    %v37 = vld [vmem:[#allocation2 + $0x38] sm:$0xff]
    %v38 = vld [vmem:[#allocation2 + $0x40] sm:$0xff]
    %v39 = vld [vmem:[#allocation2 + $0x48] sm:$0xff]
    %v40 = vld [vmem:[#allocation2 + $0x50] sm:$0xff]
    %v41 = vld [vmem:[#allocation2 + $0x58] sm:$0xff]
    %v42 = vld [vmem:[#allocation2 + $0x60] sm:$0xff]
    %v43 = vld [vmem:[#allocation2 + $0x68] sm:$0xff]
    %v44 = vld [vmem:[#allocation2 + $0x70] sm:$0xff]
    %v45 = vld [vmem:[#allocation2 + $0x78] sm:$0xff]
    %v46 = vld [vmem:[#allocation2 + $0x80] sm:$0xff]
    %v47 = vld [vmem:[#allocation2 + $0x88] sm:$0xff]
    %v48 = vld [vmem:[#allocation2 + $0x90] sm:$0xff]
    %v49 = vld [vmem:[#allocation2 + $0x98] sm:$0xff]
    %v50 = vld [vmem:[#allocation2 + $0xa0] sm:$0xff]
    %v51 = vld [vmem:[#allocation2 + $0xa8] sm:$0xff]
    %v52 = vld [vmem:[#allocation2 + $0xb0] sm:$0xff]
    %v53 = vld [vmem:[#allocation2 + $0xb8] sm:$0xff]
    %v54 = vld [vmem:[#allocation2 + $0xc0] sm:$0xff]
    %v55 = vld [vmem:[#allocation2 + $0xc8] sm:$0xff]
    %v56 = vld [vmem:[#allocation2 + $0xd0] sm:$0xff]
    %v57 = vld [vmem:[#allocation2 + $0xd8] sm:$0xff]
    %v58 = vld [vmem:[#allocation2 + $0xe0] sm:$0xff]
    %v59 = vld [vmem:[#allocation2 + $0xe8] sm:$0xff]
    %v60 = vld [vmem:[#allocation2 + $0xf0] sm:$0xff]
    %v61 = vld [vmem:[#allocation2 + $0xf8] sm:$0xff]
    %v62 = vld [vmem:[#allocation2 + $0x100] sm:$0xff]
    %v63 = vld [vmem:[#allocation2 + $0x108] sm:$0xff]
    %v64 = vld [vmem:[#allocation2 + $0x110] sm:$0xff]
    %v65 = vld [vmem:[#allocation2 + $0x118] sm:$0xff]
    %v66 = vld [vmem:[#allocation2 + $0x120] sm:$0xff]
    %v67 = vld [vmem:[#allocation2 + $0x128] sm:$0xff]
    %v68 = vld [vmem:[#allocation2 + $0x130] sm:$0xff]
    %v69 = vld [vmem:[#allocation2 + $0x138] sm:$0xff]
    %v70 = vld [vmem:[#allocation2 + $0x140] sm:$0xff]
    %v71 = vld [vmem:[#allocation2 + $0x148] sm:$0xff]
    %v72 = vld [vmem:[#allocation2 + $0x150] sm:$0xff]
    %v73 = vld [vmem:[#allocation2 + $0x158] sm:$0xff]
    %v74 = vld [vmem:[#allocation2 + $0x160] sm:$0xff]
    %v75 = vld [vmem:[#allocation2 + $0x168] sm:$0xff]
    %v76 = vld [vmem:[#allocation2 + $0x170] sm:$0xff]
    %v77 = vld [vmem:[#allocation2 + $0x178] sm:$0xff]
    %v78 = vld [vmem:[#allocation2 + $0x180] sm:$0xff]
    %v79 = vld [vmem:[#allocation2 + $0x188] sm:$0xff]
    %v80 = vld [vmem:[#allocation2 + $0x190] sm:$0xff]
    %v81 = vld [vmem:[#allocation2 + $0x198] sm:$0xff]
    %v82 = vld [vmem:[#allocation2 + $0x1a0] sm:$0xff]
    %v83 = vld [vmem:[#allocation2 + $0x1a8] sm:$0xff]
    %v84 = vld [vmem:[#allocation2 + $0x1b0] sm:$0xff]
    %v85 = vld [vmem:[#allocation2 + $0x1b8] sm:$0xff]
    %v86 = vld [vmem:[#allocation2 + $0x1c0] sm:$0xff]
    %v87 = vld [vmem:[#allocation2 + $0x1c8] sm:$0xff]
    %v88 = vld [vmem:[#allocation2 + $0x1d0] sm:$0xff]
    %v89 = vld [vmem:[#allocation2 + $0x1d8] sm:$0xff]
    %v90 = vld [vmem:[#allocation2 + $0x1e0] sm:$0xff]
    %v91 = vld [vmem:[#allocation2 + $0x1e8] sm:$0xff]
    %v92 = vld [vmem:[#allocation2 + $0x1f0] sm:$0xff]
    %v93 = vld [vmem:[#allocation2 + $0x1f8] sm:$0xff]
    %v94 = vld [vmem:[#allocation2 + $0x200] sm:$0xff]
    %v95 = vld [vmem:[#allocation2 + $0x208] sm:$0xff]
    %v96 = vld [vmem:[#allocation2 + $0x210] sm:$0xff]
    %v97 = vld [vmem:[#allocation2 + $0x218] sm:$0xff]
    %v98 = vld [vmem:[#allocation2 + $0x220] sm:$0xff]
    %v99 = vld [vmem:[#allocation2 + $0x228] sm:$0xff]
    %v100 = vld [vmem:[#allocation2 + $0x230] sm:$0xff]
    %v101 = vld [vmem:[#allocation2 + $0x238] sm:$0xff]
    %v102 = vld [vmem:[#allocation2 + $0x240] sm:$0xff]
    %v103 = vld [vmem:[#allocation2 + $0x248] sm:$0xff]
    %v104 = vld [vmem:[#allocation2 + $0x250] sm:$0xff]
    %v105 = vld [vmem:[#allocation2 + $0x258] sm:$0xff]
    %v106 = vld [vmem:[#allocation2 + $0x260] sm:$0xff]
    %v107 = vld [vmem:[#allocation2 + $0x268] sm:$0xff]
    %v108 = vld [vmem:[#allocation2 + $0x270] sm:$0xff]
    %v109 = vld [vmem:[#allocation2 + $0x278] sm:$0xff]
    %v110 = vld [vmem:[#allocation2 + $0x280] sm:$0xff]
    %v111 = vld [vmem:[#allocation2 + $0x288] sm:$0xff]
    %v112 = vld [vmem:[#allocation2 + $0x290] sm:$0xff]
    %v113 = vld [vmem:[#allocation2 + $0x298] sm:$0xff]
    %v114 = vld [vmem:[#allocation2 + $0x2a0] sm:$0xff]
    %v115 = vld [vmem:[#allocation2 + $0x2a8] sm:$0xff]
    %v116 = vld [vmem:[#allocation2 + $0x2b0] sm:$0xff]
    %v117 = vld [vmem:[#allocation2 + $0x2b8] sm:$0xff]
    %v118 = vld [vmem:[#allocation2 + $0x2c0] sm:$0xff]
    %v119 = vld [vmem:[#allocation2 + $0x2c8] sm:$0xff]
    %v120 = vld [vmem:[#allocation2 + $0x2d0] sm:$0xff]
    %v121 = vld [vmem:[#allocation2 + $0x2d8] sm:$0xff]
    %v122 = vld [vmem:[#allocation2 + $0x2e0] sm:$0xff]
    %v123 = vld [vmem:[#allocation2 + $0x2e8] sm:$0xff]
    %v124 = vld [vmem:[#allocation2 + $0x2f0] sm:$0xff]
    %v125 = vld [vmem:[#allocation2 + $0x2f8] sm:$0xff]
    %v126 = vld [vmem:[#allocation2 + $0x300] sm:$0xff]
    %v127 = vld [vmem:[#allocation2 + $0x308] sm:$0xff]
    %v128 = vld [vmem:[#allocation2 + $0x310] sm:$0xff]
    %v129 = vld [vmem:[#allocation2 + $0x318] sm:$0xff]
    %v130 = vld [vmem:[#allocation2 + $0x320] sm:$0xff]
    %v131 = vld [vmem:[#allocation2 + $0x328] sm:$0xff]
    %v132 = vld [vmem:[#allocation2 + $0x330] sm:$0xff]
    %v133 = vld [vmem:[#allocation2 + $0x338] sm:$0xff]
    %v134 = vld [vmem:[#allocation2 + $0x340] sm:$0xff]
    %v135 = vld [vmem:[#allocation2 + $0x348] sm:$0xff]
    %v136 = vld [vmem:[#allocation2 + $0x350] sm:$0xff]
    %v137 = vld [vmem:[#allocation2 + $0x358] sm:$0xff]
    %v138 = vld [vmem:[#allocation2 + $0x360] sm:$0xff]
    %v139 = vld [vmem:[#allocation2 + $0x368] sm:$0xff]
    %v140 = vld [vmem:[#allocation2 + $0x370] sm:$0xff]
    %v141 = vld [vmem:[#allocation2 + $0x378] sm:$0xff]
    %v142 = vld [vmem:[#allocation2 + $0x380] sm:$0xff]
    %v143 = vld [vmem:[#allocation2 + $0x388] sm:$0xff]
    %v144 = vld [vmem:[#allocation2 + $0x390] sm:$0xff]
    %v145 = vld [vmem:[#allocation2 + $0x398] sm:$0xff]
    %v146 = vld [vmem:[#allocation2 + $0x3a0] sm:$0xff]
    %v147 = vld [vmem:[#allocation2 + $0x3a8] sm:$0xff]
    %v148 = vld [vmem:[#allocation2 + $0x3b0] sm:$0xff]
    %v149 = vld [vmem:[#allocation2 + $0x3b8] sm:$0xff]
    %v150 = vld [vmem:[#allocation2 + $0x3c0] sm:$0xff]
    %v151 = vld [vmem:[#allocation2 + $0x3c8] sm:$0xff]
    %v152 = vld [vmem:[#allocation2 + $0x3d0] sm:$0xff]
    %v153 = vld [vmem:[#allocation2 + $0x3d8] sm:$0xff]
    %v154 = vld [vmem:[#allocation2 + $0x3e0] sm:$0xff]
    %v155 = vld [vmem:[#allocation2 + $0x3e8] sm:$0xff]
    %v156 = vld [vmem:[#allocation2 + $0x3f0] sm:$0xff]
    %v157 = vld [vmem:[#allocation2 + $0x3f8] sm:$0xff]
    %v158 = vld [vmem:[#allocation2 + $0x400] sm:$0xff]
    %v159 = vld [vmem:[#allocation2 + $0x408] sm:$0xff]
    %v160 = vld [vmem:[#allocation2 + $0x410] sm:$0xff]
    %v161 = vld [vmem:[#allocation2 + $0x418] sm:$0xff]
    %v162 = vld [vmem:[#allocation2 + $0x420] sm:$0xff]
    %v163 = vld [vmem:[#allocation2 + $0x428] sm:$0xff]
    %v164 = vld [vmem:[#allocation2 + $0x430] sm:$0xff]
    %v165 = vld [vmem:[#allocation2 + $0x438] sm:$0xff]
    %v166 = vld [vmem:[#allocation2 + $0x440] sm:$0xff]
    %v167 = vld [vmem:[#allocation2 + $0x448] sm:$0xff]
    %v168 = vld [vmem:[#allocation2 + $0x450] sm:$0xff]
    %v169 = vld [vmem:[#allocation2 + $0x458] sm:$0xff]
    %v170 = vld [vmem:[#allocation2 + $0x460] sm:$0xff]
    %v171 = vld [vmem:[#allocation2 + $0x468] sm:$0xff]
    %v172 = vld [vmem:[#allocation2 + $0x470] sm:$0xff]
    %v173 = vld [vmem:[#allocation2 + $0x478] sm:$0xff]
    %v174 = vld [vmem:[#allocation2 + $0x480] sm:$0xff]
    %v175 = vld [vmem:[#allocation2 + $0x488] sm:$0xff]
    %v176 = vld [vmem:[#allocation2 + $0x490] sm:$0xff]
    %v177 = vld [vmem:[#allocation2 + $0x498] sm:$0xff]
    %v178 = vld [vmem:[#allocation2 + $0x4a0] sm:$0xff]
    %v179 = vld [vmem:[#allocation2 + $0x4a8] sm:$0xff]
    %v180 = vld [vmem:[#allocation2 + $0x4b0] sm:$0xff]
    %v181 = vld [vmem:[#allocation2 + $0x4b8] sm:$0xff]
    %v182 = vld [vmem:[#allocation2 + $0x4c0] sm:$0xff]
    %v183 = vld [vmem:[#allocation2 + $0x4c8] sm:$0xff]
    %v184 = vld [vmem:[#allocation2 + $0x4d0] sm:$0xff]
    %v185 = vld [vmem:[#allocation2 + $0x4d8] sm:$0xff]
    %v186 = vld [vmem:[#allocation2 + $0x4e0] sm:$0xff]
    %v187 = vld [vmem:[#allocation2 + $0x4e8] sm:$0xff]
    %v188 = vld [vmem:[#allocation2 + $0x4f0] sm:$0xff]
    %v189 = vld [vmem:[#allocation2 + $0x4f8] sm:$0xff]
    %v190 = vld [vmem:[#allocation2 + $0x500] sm:$0xff]
    %v191 = vld [vmem:[#allocation2 + $0x508] sm:$0xff]
    %v192 = vld [vmem:[#allocation2 + $0x510] sm:$0xff]
    %v193 = vld [vmem:[#allocation2 + $0x518] sm:$0xff]
    %v194 = vld [vmem:[#allocation2 + $0x520] sm:$0xff]
    %v195 = vld [vmem:[#allocation2 + $0x528] sm:$0xff]
    %v196 = vld [vmem:[#allocation2 + $0x530] sm:$0xff]
    %v197 = vld [vmem:[#allocation2 + $0x538] sm:$0xff]
    %v198 = vld [vmem:[#allocation2 + $0x540] sm:$0xff]
    %v199 = vld [vmem:[#allocation2 + $0x548] sm:$0xff]
    %v200 = vld [vmem:[#allocation2 + $0x550] sm:$0xff]
    %v201 = vld [vmem:[#allocation2 + $0x558] sm:$0xff]
    %v202 = vld [vmem:[#allocation2 + $0x560] sm:$0xff]
    %v203 = vld [vmem:[#allocation2 + $0x568] sm:$0xff]
    %v204 = vld [vmem:[#allocation2 + $0x570] sm:$0xff]
    %v205 = vld [vmem:[#allocation2 + $0x578] sm:$0xff]
    %v206 = vld [vmem:[#allocation2 + $0x580] sm:$0xff]
    %v207 = vld [vmem:[#allocation2 + $0x588] sm:$0xff]
    %v208 = vld [vmem:[#allocation2 + $0x590] sm:$0xff]
    %v209 = vld [vmem:[#allocation2 + $0x598] sm:$0xff]
    %v210 = vld [vmem:[#allocation2 + $0x5a0] sm:$0xff]
    %v211 = vld [vmem:[#allocation2 + $0x5a8] sm:$0xff]
    %v212 = vld [vmem:[#allocation2 + $0x5b0] sm:$0xff]
    %v213 = vld [vmem:[#allocation2 + $0x5b8] sm:$0xff]
    %v214 = vld [vmem:[#allocation2 + $0x5c0] sm:$0xff]
    %v215 = vld [vmem:[#allocation2 + $0x5c8] sm:$0xff]
    %v216 = vld [vmem:[#allocation2 + $0x5d0] sm:$0xff]
    %v217 = vld [vmem:[#allocation2 + $0x5d8] sm:$0xff]
    %v218 = vld [vmem:[#allocation2 + $0x5e0] sm:$0xff]
    %v219 = vld [vmem:[#allocation2 + $0x5e8] sm:$0xff]
    %v220 = vld [vmem:[#allocation2 + $0x5f0] sm:$0xff]
    %v221 = vld [vmem:[#allocation2 + $0x5f8] sm:$0xff]
    %v222 = vld [vmem:[#allocation2 + $0x600] sm:$0xff]
    %v223 = vld [vmem:[#allocation2 + $0x608] sm:$0xff]
    %v224 = vld [vmem:[#allocation2 + $0x610] sm:$0xff]
    %v225 = vld [vmem:[#allocation2 + $0x618] sm:$0xff]
    %v226 = vld [vmem:[#allocation2 + $0x620] sm:$0xff]
    %v227 = vld [vmem:[#allocation2 + $0x628] sm:$0xff]
    %v228 = vld [vmem:[#allocation2 + $0x630] sm:$0xff]
    %v229 = vld [vmem:[#allocation2 + $0x638] sm:$0xff]
    %v230 = vld [vmem:[#allocation2 + $0x640] sm:$0xff]
    %v231 = vld [vmem:[#allocation2 + $0x648] sm:$0xff]
    %v232 = vld [vmem:[#allocation2 + $0x650] sm:$0xff]
    %v233 = vld [vmem:[#allocation2 + $0x658] sm:$0xff]
    %v234 = vld [vmem:[#allocation2 + $0x660] sm:$0xff]
    %v235 = vld [vmem:[#allocation2 + $0x668] sm:$0xff]
    %v236 = vld [vmem:[#allocation2 + $0x670] sm:$0xff]
    %v237 = vld [vmem:[#allocation2 + $0x678] sm:$0xff]
    %v238 = vld [vmem:[#allocation2 + $0x680] sm:$0xff]
    %v239 = vld [vmem:[#allocation2 + $0x688] sm:$0xff]
    %v240 = vld [vmem:[#allocation2 + $0x690] sm:$0xff]
    %v241 = vld [vmem:[#allocation2 + $0x698] sm:$0xff]
    %v242 = vld [vmem:[#allocation2 + $0x6a0] sm:$0xff]
    %v243 = vld [vmem:[#allocation2 + $0x6a8] sm:$0xff]
    %v244 = vld [vmem:[#allocation2 + $0x6b0] sm:$0xff]
    %v245 = vld [vmem:[#allocation2 + $0x6b8] sm:$0xff]
    %v246 = vld [vmem:[#allocation2 + $0x6c0] sm:$0xff]
    %v247 = vld [vmem:[#allocation2 + $0x6c8] sm:$0xff]
    %v248 = vld [vmem:[#allocation2 + $0x6d0] sm:$0xff]
    %v249 = vld [vmem:[#allocation2 + $0x6d8] sm:$0xff]
    %v250 = vld [vmem:[#allocation2 + $0x6e0] sm:$0xff]
    %v251 = vld [vmem:[#allocation2 + $0x6e8] sm:$0xff]
    %v252 = vld [vmem:[#allocation2 + $0x6f0] sm:$0xff]
    %v253 = vld [vmem:[#allocation2 + $0x6f8] sm:$0xff]
    %v254 = vld [vmem:[#allocation2 + $0x700] sm:$0xff]
    %v255 = vld [vmem:[#allocation2 + $0x708] sm:$0xff]
    %v256 = vld [vmem:[#allocation2 + $0x710] sm:$0xff]
    %v257 = vld [vmem:[#allocation2 + $0x718] sm:$0xff]
    %v258 = vld [vmem:[#allocation2 + $0x720] sm:$0xff]
    %v259 = vld [vmem:[#allocation2 + $0x728] sm:$0xff]
    %v260 = vld [vmem:[#allocation2 + $0x730] sm:$0xff]
    %v261 = vld [vmem:[#allocation2 + $0x738] sm:$0xff]
    %v262 = vld [vmem:[#allocation2 + $0x740] sm:$0xff]
    %v263 = vld [vmem:[#allocation2 + $0x748] sm:$0xff]
    %v264 = vld [vmem:[#allocation2 + $0x750] sm:$0xff]
    %v265 = vld [vmem:[#allocation2 + $0x758] sm:$0xff]
    %v266 = vld [vmem:[#allocation2 + $0x760] sm:$0xff]
    %v267 = vld [vmem:[#allocation2 + $0x768] sm:$0xff]
    %v268 = vld [vmem:[#allocation2 + $0x770] sm:$0xff]
    %v269 = vld [vmem:[#allocation2 + $0x778] sm:$0xff]
    %v270 = vld [vmem:[#allocation2 + $0x780] sm:$0xff]
    %v271 = vld [vmem:[#allocation2 + $0x788] sm:$0xff]
    %v272 = vld [vmem:[#allocation2 + $0x790] sm:$0xff]
    %v273 = vld [vmem:[#allocation2 + $0x798] sm:$0xff]
    %v274 = vld [vmem:[#allocation2 + $0x7a0] sm:$0xff]
    %v275 = vld [vmem:[#allocation2 + $0x7a8] sm:$0xff]
    %v276 = vld [vmem:[#allocation2 + $0x7b0] sm:$0xff]
    %v277 = vld [vmem:[#allocation2 + $0x7b8] sm:$0xff]
    %v278 = vld [vmem:[#allocation2 + $0x7c0] sm:$0xff]
    %v279 = vld [vmem:[#allocation2 + $0x7c8] sm:$0xff]
    %v280 = vld [vmem:[#allocation2 + $0x7d0] sm:$0xff]
    %v281 = vld [vmem:[#allocation2 + $0x7d8] sm:$0xff]
    %v282 = vld [vmem:[#allocation2 + $0x7e0] sm:$0xff]
    %v283 = vld [vmem:[#allocation2 + $0x7e8] sm:$0xff]
    %v284 = vld [vmem:[#allocation2 + $0x7f0] sm:$0xff]
    %v285 = vld [vmem:[#allocation2 + $0x7f8] sm:$0xff]
    %v286 = vld [vmem:[%s0] sm:$0xff]
    %v287 = vld [vmem:[%s0 + $0x8] sm:$0xff]
    %288 = vmatprep.subr.mxu0 %v31
    %289 = vmatpush1.msra.mxu0 %v30
    %290 = vmatprep.subr.mxu0 %v39
    %291 = vmatpush1.msra.mxu0 %v38
    %292 = vmatprep.subr.mxu0 %v47
    %293 = vmatpush1.msra.mxu0 %v46
    %294 = vmatprep.subr.mxu0 %v55
    %295 = vmatpush1.msra.mxu0 %v54
    %296 = vmatprep.subr.mxu0 %v63
    %297 = vmatpush1.msra.mxu0 %v62
    %298 = vmatprep.subr.mxu0 %v71
    %299 = vmatpush1.msra.mxu0 %v70
    %300 = vmatprep.subr.mxu0 %v79
    %301 = vmatpush1.msra.mxu0 %v78
    %302 = vmatprep.subr.mxu0 %v87
    %303 = vmatpush1.msra.mxu0 %v86
    %304 = vmatprep.subr.mxu0 %v95
    %305 = vmatpush1.msra.mxu0 %v94
    %306 = vmatprep.subr.mxu0 %v103
    %307 = vmatpush1.msra.mxu0 %v102
    %308 = vmatprep.subr.mxu0 %v111
    %309 = vmatpush1.msra.mxu0 %v110
    %310 = vmatprep.subr.mxu0 %v119
    %311 = vmatpush1.msra.mxu0 %v118
    %312 = vmatprep.subr.mxu0 %v127
    %313 = vmatpush1.msra.mxu0 %v126
    %314 = vmatprep.subr.mxu0 %v135
    %315 = vmatpush1.msra.mxu0 %v134
    %316 = vmatprep.subr.mxu0 %v143
    %317 = vmatpush1.msra.mxu0 %v142
    %318 = vmatprep.subr.mxu0 %v151
    %319 = vmatpush1.msra.mxu0 %v150
    %320 = vmatprep.subr.mxu0 %v159
    %321 = vmatpush1.msra.mxu0 %v158
    %322 = vmatprep.subr.mxu0 %v167
    %323 = vmatpush1.msra.mxu0 %v166
    %324 = vmatprep.subr.mxu0 %v175
    %325 = vmatpush1.msra.mxu0 %v174
    %326 = vmatprep.subr.mxu0 %v183
    %327 = vmatpush1.msra.mxu0 %v182
    %328 = vmatprep.subr.mxu0 %v191
    %329 = vmatpush1.msra.mxu0 %v190
    %330 = vmatprep.subr.mxu0 %v199
    %331 = vmatpush1.msra.mxu0 %v198
    %332 = vmatprep.subr.mxu0 %v207
    %333 = vmatpush1.msra.mxu0 %v206
    %334 = vmatprep.subr.mxu0 %v215
    %335 = vmatpush1.msra.mxu0 %v214
    %336 = vmatprep.subr.mxu0 %v223
    %337 = vmatpush1.msra.mxu0 %v222
    %338 = vmatprep.subr.mxu0 %v231
    %339 = vmatpush1.msra.mxu0 %v230
    %340 = vmatprep.subr.mxu0 %v239
    %341 = vmatpush1.msra.mxu0 %v238
    %342 = vmatprep.subr.mxu0 %v247
    %343 = vmatpush1.msra.mxu0 %v246
    %344 = vmatprep.subr.mxu0 %v255
    %345 = vmatpush1.msra.mxu0 %v254
    %346 = vmatprep.subr.mxu0 %v263
    %347 = vmatpush1.msra.mxu0 %v262
    %348 = vmatprep.subr.mxu0 %v271
    %349 = vmatpush1.msra.mxu0 %v270
    %350 = vmatprep.subr.mxu0 %v279
    %351 = vmatpush1.msra.mxu0 %v278
    %352 = vmatprep.mubr.f32.mxu0 %v287
    %353 = vmatmul.mubr.f32.gmra.mrb[0].mxu0 %v286
    %v354 = vpop.f32.mrb[0].mxu0
    %v355 = vadd.f32 0.0, %v354
    %v356 = vpop.f32.mrb[0].mxu0
    %v357 = vadd.f32 0.0, %v356
    %358 = vdwg.mxu0
    %359 = vmatprep.subr.mxu0 %v33
    %360 = vmatpush1.msra.mxu0 %v32
    %361 = vmatprep.subr.mxu0 %v41
    %362 = vmatpush1.msra.mxu0 %v40
    %363 = vmatprep.subr.mxu0 %v49
    %364 = vmatpush1.msra.mxu0 %v48
    %365 = vmatprep.subr.mxu0 %v57
    %366 = vmatpush1.msra.mxu0 %v56
    %367 = vmatprep.subr.mxu0 %v65
    %368 = vmatpush1.msra.mxu0 %v64
    %369 = vmatprep.subr.mxu0 %v73
    %370 = vmatpush1.msra.mxu0 %v72
    %371 = vmatprep.subr.mxu0 %v81
    %372 = vmatpush1.msra.mxu0 %v80
    %373 = vmatprep.subr.mxu0 %v89
    %374 = vmatpush1.msra.mxu0 %v88
    %375 = vmatprep.subr.mxu0 %v97
    %376 = vmatpush1.msra.mxu0 %v96
    %377 = vmatprep.subr.mxu0 %v105
    %378 = vmatpush1.msra.mxu0 %v104
    %379 = vmatprep.subr.mxu0 %v113
    %380 = vmatpush1.msra.mxu0 %v112
    %381 = vmatprep.subr.mxu0 %v121
    %382 = vmatpush1.msra.mxu0 %v120
    %383 = vmatprep.subr.mxu0 %v129
    %384 = vmatpush1.msra.mxu0 %v128
    %385 = vmatprep.subr.mxu0 %v137
    %386 = vmatpush1.msra.mxu0 %v136
    %387 = vmatprep.subr.mxu0 %v145
    %388 = vmatpush1.msra.mxu0 %v144
    %389 = vmatprep.subr.mxu0 %v153
    %390 = vmatpush1.msra.mxu0 %v152
    %391 = vmatprep.subr.mxu0 %v161
    %392 = vmatpush1.msra.mxu0 %v160
    %393 = vmatprep.subr.mxu0 %v169
    %394 = vmatpush1.msra.mxu0 %v168
    %395 = vmatprep.subr.mxu0 %v177
    %396 = vmatpush1.msra.mxu0 %v176
    %397 = vmatprep.subr.mxu0 %v185
    %398 = vmatpush1.msra.mxu0 %v184
    %399 = vmatprep.subr.mxu0 %v193
    %400 = vmatpush1.msra.mxu0 %v192
    %401 = vmatprep.subr.mxu0 %v201
    %402 = vmatpush1.msra.mxu0 %v200
    %403 = vmatprep.subr.mxu0 %v209
    %404 = vmatpush1.msra.mxu0 %v208
    %405 = vmatprep.subr.mxu0 %v217
    %406 = vmatpush1.msra.mxu0 %v216
    %407 = vmatprep.subr.mxu0 %v225
    %408 = vmatpush1.msra.mxu0 %v224
    %409 = vmatprep.subr.mxu0 %v233
    %410 = vmatpush1.msra.mxu0 %v232
    %411 = vmatprep.subr.mxu0 %v241
    %412 = vmatpush1.msra.mxu0 %v240
    %413 = vmatprep.subr.mxu0 %v249
    %414 = vmatpush1.msra.mxu0 %v248
    %415 = vmatprep.subr.mxu0 %v257
    %416 = vmatpush1.msra.mxu0 %v256
    %417 = vmatprep.subr.mxu0 %v265
    %418 = vmatpush1.msra.mxu0 %v264
    %419 = vmatprep.subr.mxu0 %v273
    %420 = vmatpush1.msra.mxu0 %v272
    %421 = vmatprep.subr.mxu0 %v281
    %422 = vmatpush1.msra.mxu0 %v280
    %423 = vmatprep.mubr.f32.mxu0 %v287
    %424 = vmatmul.mubr.f32.gmra.mrb[0].mxu0 %v286
    %v425 = vpop.f32.mrb[0].mxu0
    %v426 = vadd.f32 0.0, %v425
    %v427 = vpop.f32.mrb[0].mxu0
    %v428 = vadd.f32 0.0, %v427
    %429 = vdwg.mxu0
    %430 = vmatprep.subr.mxu0 %v35
    %431 = vmatpush1.msra.mxu0 %v34
    %432 = vmatprep.subr.mxu0 %v43
    %433 = vmatpush1.msra.mxu0 %v42
    %434 = vmatprep.subr.mxu0 %v51
    %435 = vmatpush1.msra.mxu0 %v50
    %436 = vmatprep.subr.mxu0 %v59
    %437 = vmatpush1.msra.mxu0 %v58
    %438 = vmatprep.subr.mxu0 %v67
    %439 = vmatpush1.msra.mxu0 %v66
    %440 = vmatprep.subr.mxu0 %v75
    %441 = vmatpush1.msra.mxu0 %v74
    %442 = vmatprep.subr.mxu0 %v83
    %443 = vmatpush1.msra.mxu0 %v82
    %444 = vmatprep.subr.mxu0 %v91
    %445 = vmatpush1.msra.mxu0 %v90
    %446 = vmatprep.subr.mxu0 %v99
    %447 = vmatpush1.msra.mxu0 %v98
    %448 = vmatprep.subr.mxu0 %v107
    %449 = vmatpush1.msra.mxu0 %v106
    %450 = vmatprep.subr.mxu0 %v115
    %451 = vmatpush1.msra.mxu0 %v114
    %452 = vmatprep.subr.mxu0 %v123
    %453 = vmatpush1.msra.mxu0 %v122
    %454 = vmatprep.subr.mxu0 %v131
    %455 = vmatpush1.msra.mxu0 %v130
    %456 = vmatprep.subr.mxu0 %v139
    %457 = vmatpush1.msra.mxu0 %v138
    %458 = vmatprep.subr.mxu0 %v147
    %459 = vmatpush1.msra.mxu0 %v146
    %460 = vmatprep.subr.mxu0 %v155
    %461 = vmatpush1.msra.mxu0 %v154
    %462 = vmatprep.subr.mxu0 %v163
    %463 = vmatpush1.msra.mxu0 %v162
    %464 = vmatprep.subr.mxu0 %v171
    %465 = vmatpush1.msra.mxu0 %v170
    %466 = vmatprep.subr.mxu0 %v179
    %467 = vmatpush1.msra.mxu0 %v178
    %468 = vmatprep.subr.mxu0 %v187
    %469 = vmatpush1.msra.mxu0 %v186
    %470 = vmatprep.subr.mxu0 %v195
    %471 = vmatpush1.msra.mxu0 %v194
    %472 = vmatprep.subr.mxu0 %v203
    %473 = vmatpush1.msra.mxu0 %v202
    %474 = vmatprep.subr.mxu0 %v211
    %475 = vmatpush1.msra.mxu0 %v210
    %476 = vmatprep.subr.mxu0 %v219
    %477 = vmatpush1.msra.mxu0 %v218
    %478 = vmatprep.subr.mxu0 %v227
    %479 = vmatpush1.msra.mxu0 %v226
    %480 = vmatprep.subr.mxu0 %v235
    %481 = vmatpush1.msra.mxu0 %v234
    %482 = vmatprep.subr.mxu0 %v243
    %483 = vmatpush1.msra.mxu0 %v242
    %484 = vmatprep.subr.mxu0 %v251
    %485 = vmatpush1.msra.mxu0 %v250
    %486 = vmatprep.subr.mxu0 %v259
    %487 = vmatpush1.msra.mxu0 %v258
    %488 = vmatprep.subr.mxu0 %v267
    %489 = vmatpush1.msra.mxu0 %v266
    %490 = vmatprep.subr.mxu0 %v275
    %491 = vmatpush1.msra.mxu0 %v274
    %492 = vmatprep.subr.mxu0 %v283
    %493 = vmatpush1.msra.mxu0 %v282
    %494 = vmatprep.mubr.f32.mxu0 %v287
    %495 = vmatmul.mubr.f32.gmra.mrb[0].mxu0 %v286
    %v496 = vpop.f32.mrb[0].mxu0
    %v497 = vadd.f32 0.0, %v496
    %v498 = vpop.f32.mrb[0].mxu0
    %v499 = vadd.f32 0.0, %v498
    %500 = vdwg.mxu0
    %501 = vmatprep.subr.mxu0 %v37
    %502 = vmatpush1.msra.mxu0 %v36
    %503 = vmatprep.subr.mxu0 %v45
    %504 = vmatpush1.msra.mxu0 %v44
    %505 = vmatprep.subr.mxu0 %v53
    %506 = vmatpush1.msra.mxu0 %v52
    %507 = vmatprep.subr.mxu0 %v61
    %508 = vmatpush1.msra.mxu0 %v60
    %509 = vmatprep.subr.mxu0 %v69
    %510 = vmatpush1.msra.mxu0 %v68
    %511 = vmatprep.subr.mxu0 %v77
    %512 = vmatpush1.msra.mxu0 %v76
    %513 = vmatprep.subr.mxu0 %v85
    %514 = vmatpush1.msra.mxu0 %v84
    %515 = vmatprep.subr.mxu0 %v93
    %516 = vmatpush1.msra.mxu0 %v92
    %517 = vmatprep.subr.mxu0 %v101
    %518 = vmatpush1.msra.mxu0 %v100
    %519 = vmatprep.subr.mxu0 %v109
    %520 = vmatpush1.msra.mxu0 %v108
    %521 = vmatprep.subr.mxu0 %v117
    %522 = vmatpush1.msra.mxu0 %v116
    %523 = vmatprep.subr.mxu0 %v125
    %524 = vmatpush1.msra.mxu0 %v124
    %525 = vmatprep.subr.mxu0 %v133
    %526 = vmatpush1.msra.mxu0 %v132
    %527 = vmatprep.subr.mxu0 %v141
    %528 = vmatpush1.msra.mxu0 %v140
    %529 = vmatprep.subr.mxu0 %v149
    %530 = vmatpush1.msra.mxu0 %v148
    %531 = vmatprep.subr.mxu0 %v157
    %532 = vmatpush1.msra.mxu0 %v156
    %533 = vmatprep.subr.mxu0 %v165
    %534 = vmatpush1.msra.mxu0 %v164
    %535 = vmatprep.subr.mxu0 %v173
    %536 = vmatpush1.msra.mxu0 %v172
    %537 = vmatprep.subr.mxu0 %v181
    %538 = vmatpush1.msra.mxu0 %v180
    %539 = vmatprep.subr.mxu0 %v189
    %540 = vmatpush1.msra.mxu0 %v188
    %541 = vmatprep.subr.mxu0 %v197
    %542 = vmatpush1.msra.mxu0 %v196
    %543 = vmatprep.subr.mxu0 %v205
    %544 = vmatpush1.msra.mxu0 %v204
    %545 = vmatprep.subr.mxu0 %v213
    %546 = vmatpush1.msra.mxu0 %v212
    %547 = vmatprep.subr.mxu0 %v221
    %548 = vmatpush1.msra.mxu0 %v220
    %549 = vmatprep.subr.mxu0 %v229
    %550 = vmatpush1.msra.mxu0 %v228
    %551 = vmatprep.subr.mxu0 %v237
    %552 = vmatpush1.msra.mxu0 %v236
    %553 = vmatprep.subr.mxu0 %v245
    %554 = vmatpush1.msra.mxu0 %v244
    %555 = vmatprep.subr.mxu0 %v253
    %556 = vmatpush1.msra.mxu0 %v252
    %557 = vmatprep.subr.mxu0 %v261
    %558 = vmatpush1.msra.mxu0 %v260
    %559 = vmatprep.subr.mxu0 %v269
    %560 = vmatpush1.msra.mxu0 %v268
    %561 = vmatprep.subr.mxu0 %v277
    %562 = vmatpush1.msra.mxu0 %v276
    %563 = vmatprep.subr.mxu0 %v285
    %564 = vmatpush1.msra.mxu0 %v284
    %565 = vmatprep.mubr.f32.mxu0 %v287
    %566 = vmatmul.mubr.f32.gmra.mrb[0].mxu0 %v286
    %v567 = vpop.f32.mrb[0].mxu0
    %v568 = vadd.f32 0.0, %v567
    %v569 = vpop.f32.mrb[0].mxu0
    %v570 = vadd.f32 0.0, %v569
    %571 = vdwg.mxu0
    %572 = vst [vmem:[%s3] sm:$0xff] %v355
    %573 = vst [vmem:[%s3 + $0x8] sm:$0xff] %v357
    %574 = vst [vmem:[%s3 + $0x10] sm:$0xff] %v426
    %575 = vst [vmem:[%s3 + $0x18] sm:$0xff] %v428
    %576 = vst [vmem:[%s3 + $0x20] sm:$0xff] %v497
    %577 = vst [vmem:[%s3 + $0x28] sm:$0xff] %v499
    %578 = vst [vmem:[%s3 + $0x30] sm:$0xff] %v568
    %579 = vst [vmem:[%s3 + $0x38] sm:$0xff] %v570
    %v580 = vld [vmem:[%s1] sm:$0xff]
    %v581 = vld [vmem:[%s1 + $0x8] sm:$0xff]
    %582 = vmatprep.subr.mxu0 %v31
    %583 = vmatpush1.msra.mxu0 %v30
    %584 = vmatprep.subr.mxu0 %v39
    %585 = vmatpush1.msra.mxu0 %v38
    %586 = vmatprep.subr.mxu0 %v47
    %587 = vmatpush1.msra.mxu0 %v46
    %588 = vmatprep.subr.mxu0 %v55
    %589 = vmatpush1.msra.mxu0 %v54
    %590 = vmatprep.subr.mxu0 %v63
    %591 = vmatpush1.msra.mxu0 %v62
    %592 = vmatprep.subr.mxu0 %v71
    %593 = vmatpush1.msra.mxu0 %v70
    %594 = vmatprep.subr.mxu0 %v79
    %595 = vmatpush1.msra.mxu0 %v78
    %596 = vmatprep.subr.mxu0 %v87
    %597 = vmatpush1.msra.mxu0 %v86
    %598 = vmatprep.subr.mxu0 %v95
    %599 = vmatpush1.msra.mxu0 %v94
    %600 = vmatprep.subr.mxu0 %v103
    %601 = vmatpush1.msra.mxu0 %v102
    %602 = vmatprep.subr.mxu0 %v111
    %603 = vmatpush1.msra.mxu0 %v110
    %604 = vmatprep.subr.mxu0 %v119
    %605 = vmatpush1.msra.mxu0 %v118
    %606 = vmatprep.subr.mxu0 %v127
    %607 = vmatpush1.msra.mxu0 %v126
    %608 = vmatprep.subr.mxu0 %v135
    %609 = vmatpush1.msra.mxu0 %v134
    %610 = vmatprep.subr.mxu0 %v143
    %611 = vmatpush1.msra.mxu0 %v142
    %612 = vmatprep.subr.mxu0 %v151
    %613 = vmatpush1.msra.mxu0 %v150
    %614 = vmatprep.subr.mxu0 %v159
    %615 = vmatpush1.msra.mxu0 %v158
    %616 = vmatprep.subr.mxu0 %v167
    %617 = vmatpush1.msra.mxu0 %v166
    %618 = vmatprep.subr.mxu0 %v175
    %619 = vmatpush1.msra.mxu0 %v174
    %620 = vmatprep.subr.mxu0 %v183
    %621 = vmatpush1.msra.mxu0 %v182
    %622 = vmatprep.subr.mxu0 %v191
    %623 = vmatpush1.msra.mxu0 %v190
    %624 = vmatprep.subr.mxu0 %v199
    %625 = vmatpush1.msra.mxu0 %v198
    %626 = vmatprep.subr.mxu0 %v207
    %627 = vmatpush1.msra.mxu0 %v206
    %628 = vmatprep.subr.mxu0 %v215
    %629 = vmatpush1.msra.mxu0 %v214
    %630 = vmatprep.subr.mxu0 %v223
    %631 = vmatpush1.msra.mxu0 %v222
    %632 = vmatprep.subr.mxu0 %v231
    %633 = vmatpush1.msra.mxu0 %v230
    %634 = vmatprep.subr.mxu0 %v239
    %635 = vmatpush1.msra.mxu0 %v238
    %636 = vmatprep.subr.mxu0 %v247
    %637 = vmatpush1.msra.mxu0 %v246
    %638 = vmatprep.subr.mxu0 %v255
    %639 = vmatpush1.msra.mxu0 %v254
    %640 = vmatprep.subr.mxu0 %v263
    %641 = vmatpush1.msra.mxu0 %v262
    %642 = vmatprep.subr.mxu0 %v271
    %643 = vmatpush1.msra.mxu0 %v270
    %644 = vmatprep.subr.mxu0 %v279
    %645 = vmatpush1.msra.mxu0 %v278
    %646 = vmatprep.mubr.f32.mxu0 %v581
    %647 = vmatmul.mubr.f32.gmra.mrb[0].mxu0 %v580
    %v648 = vpop.f32.mrb[0].mxu0
    %v649 = vadd.f32 0.0, %v648
    %v650 = vpop.f32.mrb[0].mxu0
    %v651 = vadd.f32 0.0, %v650
    %652 = vdwg.mxu0
    %653 = vmatprep.subr.mxu0 %v33
    %654 = vmatpush1.msra.mxu0 %v32
    %655 = vmatprep.subr.mxu0 %v41
    %656 = vmatpush1.msra.mxu0 %v40
    %657 = vmatprep.subr.mxu0 %v49
    %658 = vmatpush1.msra.mxu0 %v48
    %659 = vmatprep.subr.mxu0 %v57
    %660 = vmatpush1.msra.mxu0 %v56
    %661 = vmatprep.subr.mxu0 %v65
    %662 = vmatpush1.msra.mxu0 %v64
    %663 = vmatprep.subr.mxu0 %v73
    %664 = vmatpush1.msra.mxu0 %v72
    %665 = vmatprep.subr.mxu0 %v81
    %666 = vmatpush1.msra.mxu0 %v80
    %667 = vmatprep.subr.mxu0 %v89
    %668 = vmatpush1.msra.mxu0 %v88
    %669 = vmatprep.subr.mxu0 %v97
    %670 = vmatpush1.msra.mxu0 %v96
    %671 = vmatprep.subr.mxu0 %v105
    %672 = vmatpush1.msra.mxu0 %v104
    %673 = vmatprep.subr.mxu0 %v113
    %674 = vmatpush1.msra.mxu0 %v112
    %675 = vmatprep.subr.mxu0 %v121
    %676 = vmatpush1.msra.mxu0 %v120
    %677 = vmatprep.subr.mxu0 %v129
    %678 = vmatpush1.msra.mxu0 %v128
    %679 = vmatprep.subr.mxu0 %v137
    %680 = vmatpush1.msra.mxu0 %v136
    %681 = vmatprep.subr.mxu0 %v145
    %682 = vmatpush1.msra.mxu0 %v144
    %683 = vmatprep.subr.mxu0 %v153
    %684 = vmatpush1.msra.mxu0 %v152
    %685 = vmatprep.subr.mxu0 %v161
    %686 = vmatpush1.msra.mxu0 %v160
    %687 = vmatprep.subr.mxu0 %v169
    %688 = vmatpush1.msra.mxu0 %v168
    %689 = vmatprep.subr.mxu0 %v177
    %690 = vmatpush1.msra.mxu0 %v176
    %691 = vmatprep.subr.mxu0 %v185
    %692 = vmatpush1.msra.mxu0 %v184
    %693 = vmatprep.subr.mxu0 %v193
    %694 = vmatpush1.msra.mxu0 %v192
    %695 = vmatprep.subr.mxu0 %v201
    %696 = vmatpush1.msra.mxu0 %v200
    %697 = vmatprep.subr.mxu0 %v209
    %698 = vmatpush1.msra.mxu0 %v208
    %699 = vmatprep.subr.mxu0 %v217
    %700 = vmatpush1.msra.mxu0 %v216
    %701 = vmatprep.subr.mxu0 %v225
    %702 = vmatpush1.msra.mxu0 %v224
    %703 = vmatprep.subr.mxu0 %v233
    %704 = vmatpush1.msra.mxu0 %v232
    %705 = vmatprep.subr.mxu0 %v241
    %706 = vmatpush1.msra.mxu0 %v240
    %707 = vmatprep.subr.mxu0 %v249
    %708 = vmatpush1.msra.mxu0 %v248
    %709 = vmatprep.subr.mxu0 %v257
    %710 = vmatpush1.msra.mxu0 %v256
    %711 = vmatprep.subr.mxu0 %v265
    %712 = vmatpush1.msra.mxu0 %v264
    %713 = vmatprep.subr.mxu0 %v273
    %714 = vmatpush1.msra.mxu0 %v272
    %715 = vmatprep.subr.mxu0 %v281
    %716 = vmatpush1.msra.mxu0 %v280
    %717 = vmatprep.mubr.f32.mxu0 %v581
    %718 = vmatmul.mubr.f32.gmra.mrb[0].mxu0 %v580
    %v719 = vpop.f32.mrb[0].mxu0
    %v720 = vadd.f32 0.0, %v719
    %v721 = vpop.f32.mrb[0].mxu0
    %v722 = vadd.f32 0.0, %v721
    %723 = vdwg.mxu0
    %724 = vmatprep.subr.mxu0 %v35
    %725 = vmatpush1.msra.mxu0 %v34
    %726 = vmatprep.subr.mxu0 %v43
    %727 = vmatpush1.msra.mxu0 %v42
    %728 = vmatprep.subr.mxu0 %v51
    %729 = vmatpush1.msra.mxu0 %v50
    %730 = vmatprep.subr.mxu0 %v59
    %731 = vmatpush1.msra.mxu0 %v58
    %732 = vmatprep.subr.mxu0 %v67
    %733 = vmatpush1.msra.mxu0 %v66
    %734 = vmatprep.subr.mxu0 %v75
    %735 = vmatpush1.msra.mxu0 %v74
    %736 = vmatprep.subr.mxu0 %v83
    %737 = vmatpush1.msra.mxu0 %v82
    %738 = vmatprep.subr.mxu0 %v91
    %739 = vmatpush1.msra.mxu0 %v90
    %740 = vmatprep.subr.mxu0 %v99
    %741 = vmatpush1.msra.mxu0 %v98
    %742 = vmatprep.subr.mxu0 %v107
    %743 = vmatpush1.msra.mxu0 %v106
    %744 = vmatprep.subr.mxu0 %v115
    %745 = vmatpush1.msra.mxu0 %v114
    %746 = vmatprep.subr.mxu0 %v123
    %747 = vmatpush1.msra.mxu0 %v122
    %748 = vmatprep.subr.mxu0 %v131
    %749 = vmatpush1.msra.mxu0 %v130
    %750 = vmatprep.subr.mxu0 %v139
    %751 = vmatpush1.msra.mxu0 %v138
    %752 = vmatprep.subr.mxu0 %v147
    %753 = vmatpush1.msra.mxu0 %v146
    %754 = vmatprep.subr.mxu0 %v155
    %755 = vmatpush1.msra.mxu0 %v154
    %756 = vmatprep.subr.mxu0 %v163
    %757 = vmatpush1.msra.mxu0 %v162
    %758 = vmatprep.subr.mxu0 %v171
    %759 = vmatpush1.msra.mxu0 %v170
    %760 = vmatprep.subr.mxu0 %v179
    %761 = vmatpush1.msra.mxu0 %v178
    %762 = vmatprep.subr.mxu0 %v187
    %763 = vmatpush1.msra.mxu0 %v186
    %764 = vmatprep.subr.mxu0 %v195
    %765 = vmatpush1.msra.mxu0 %v194
    %766 = vmatprep.subr.mxu0 %v203
    %767 = vmatpush1.msra.mxu0 %v202
    %768 = vmatprep.subr.mxu0 %v211
    %769 = vmatpush1.msra.mxu0 %v210
    %770 = vmatprep.subr.mxu0 %v219
    %771 = vmatpush1.msra.mxu0 %v218
    %772 = vmatprep.subr.mxu0 %v227
    %773 = vmatpush1.msra.mxu0 %v226
    %774 = vmatprep.subr.mxu0 %v235
    %775 = vmatpush1.msra.mxu0 %v234
    %776 = vmatprep.subr.mxu0 %v243
    %777 = vmatpush1.msra.mxu0 %v242
    %778 = vmatprep.subr.mxu0 %v251
    %779 = vmatpush1.msra.mxu0 %v250
    %780 = vmatprep.subr.mxu0 %v259
    %781 = vmatpush1.msra.mxu0 %v258
    %782 = vmatprep.subr.mxu0 %v267
    %783 = vmatpush1.msra.mxu0 %v266
    %784 = vmatprep.subr.mxu0 %v275
    %785 = vmatpush1.msra.mxu0 %v274
    %786 = vmatprep.subr.mxu0 %v283
    %787 = vmatpush1.msra.mxu0 %v282
    %788 = vmatprep.mubr.f32.mxu0 %v581
    %789 = vmatmul.mubr.f32.gmra.mrb[0].mxu0 %v580
    %v790 = vpop.f32.mrb[0].mxu0
    %v791 = vadd.f32 0.0, %v790
    %v792 = vpop.f32.mrb[0].mxu0
    %v793 = vadd.f32 0.0, %v792
    %794 = vdwg.mxu0
    %795 = vmatprep.subr.mxu0 %v37
    %796 = vmatpush1.msra.mxu0 %v36
    %797 = vmatprep.subr.mxu0 %v45
    %798 = vmatpush1.msra.mxu0 %v44
    %799 = vmatprep.subr.mxu0 %v53
    %800 = vmatpush1.msra.mxu0 %v52
    %801 = vmatprep.subr.mxu0 %v61
    %802 = vmatpush1.msra.mxu0 %v60
    %803 = vmatprep.subr.mxu0 %v69
    %804 = vmatpush1.msra.mxu0 %v68
    %805 = vmatprep.subr.mxu0 %v77
    %806 = vmatpush1.msra.mxu0 %v76
    %807 = vmatprep.subr.mxu0 %v85
    %808 = vmatpush1.msra.mxu0 %v84
    %809 = vmatprep.subr.mxu0 %v93
    %810 = vmatpush1.msra.mxu0 %v92
    %811 = vmatprep.subr.mxu0 %v101
    %812 = vmatpush1.msra.mxu0 %v100
    %813 = vmatprep.subr.mxu0 %v109
    %814 = vmatpush1.msra.mxu0 %v108
    %815 = vmatprep.subr.mxu0 %v117
    %816 = vmatpush1.msra.mxu0 %v116
    %817 = vmatprep.subr.mxu0 %v125
    %818 = vmatpush1.msra.mxu0 %v124
    %819 = vmatprep.subr.mxu0 %v133
    %820 = vmatpush1.msra.mxu0 %v132
    %821 = vmatprep.subr.mxu0 %v141
    %822 = vmatpush1.msra.mxu0 %v140
    %823 = vmatprep.subr.mxu0 %v149
    %824 = vmatpush1.msra.mxu0 %v148
    %825 = vmatprep.subr.mxu0 %v157
    %826 = vmatpush1.msra.mxu0 %v156
    %827 = vmatprep.subr.mxu0 %v165
    %828 = vmatpush1.msra.mxu0 %v164
    %829 = vmatprep.subr.mxu0 %v173
    %830 = vmatpush1.msra.mxu0 %v172
    %831 = vmatprep.subr.mxu0 %v181
    %832 = vmatpush1.msra.mxu0 %v180
    %833 = vmatprep.subr.mxu0 %v189
    %834 = vmatpush1.msra.mxu0 %v188
    %835 = vmatprep.subr.mxu0 %v197
    %836 = vmatpush1.msra.mxu0 %v196
    %837 = vmatprep.subr.mxu0 %v205
    %838 = vmatpush1.msra.mxu0 %v204
    %839 = vmatprep.subr.mxu0 %v213
    %840 = vmatpush1.msra.mxu0 %v212
    %841 = vmatprep.subr.mxu0 %v221
    %842 = vmatpush1.msra.mxu0 %v220
    %843 = vmatprep.subr.mxu0 %v229
    %844 = vmatpush1.msra.mxu0 %v228
    %845 = vmatprep.subr.mxu0 %v237
    %846 = vmatpush1.msra.mxu0 %v236
    %847 = vmatprep.subr.mxu0 %v245
    %848 = vmatpush1.msra.mxu0 %v244
    %849 = vmatprep.subr.mxu0 %v253
    %850 = vmatpush1.msra.mxu0 %v252
    %851 = vmatprep.subr.mxu0 %v261
    %852 = vmatpush1.msra.mxu0 %v260
    %853 = vmatprep.subr.mxu0 %v269
    %854 = vmatpush1.msra.mxu0 %v268
    %855 = vmatprep.subr.mxu0 %v277
    %856 = vmatpush1.msra.mxu0 %v276
    %857 = vmatprep.subr.mxu0 %v285
    %858 = vmatpush1.msra.mxu0 %v284
    %859 = vmatprep.mubr.f32.mxu0 %v581
    %860 = vmatmul.mubr.f32.gmra.mrb[0].mxu0 %v580
    %v861 = vpop.f32.mrb[0].mxu0
    %v862 = vadd.f32 0.0, %v861
    %v863 = vpop.f32.mrb[0].mxu0
    %v864 = vadd.f32 0.0, %v863
    %865 = vdwg.mxu0
    %866 = vst [vmem:[%s4] sm:$0xff] %v649
    %867 = vst [vmem:[%s4 + $0x8] sm:$0xff] %v651
    %868 = vst [vmem:[%s4 + $0x10] sm:$0xff] %v720
    %869 = vst [vmem:[%s4 + $0x18] sm:$0xff] %v722
    %870 = vst [vmem:[%s4 + $0x20] sm:$0xff] %v791
    %871 = vst [vmem:[%s4 + $0x28] sm:$0xff] %v793
    %872 = vst [vmem:[%s4 + $0x30] sm:$0xff] %v862
    %873 = vst [vmem:[%s4 + $0x38] sm:$0xff] %v864
    // Predicated region
    $region18: #{complex_upsampling_bilinear2d.1} parent=1 // pred_check
      _
    $region19: #{complex_upsampling_bilinear2d.1} parent=1 // pred_check_branch
      %875 = sbr.rel (0) target = $region21
    $region20: #{complex_upsampling_bilinear2d.1} parent=1 // pred_region
      _
    $region21: #{complex_upsampling_bilinear2d.1} parent=1 // pred_fallthru
      _
    // Predicated region
    $region22: #{complex_upsampling_bilinear2d.1} parent=1 // pred_check
      _
    $region23: #{complex_upsampling_bilinear2d.1} parent=1 // pred_check_branch
      %877 = sbr.rel (0) target = $region25
    $region24: #{complex_upsampling_bilinear2d.1} parent=1 // pred_region
      _
    $region25: #{complex_upsampling_bilinear2d.1} parent=1 // pred_fallthru
      _
    // Predicated region
    $region26: #{complex_upsampling_bilinear2d.1} parent=1 // pred_check
      _
    $region27: #{complex_upsampling_bilinear2d.1} parent=1 // pred_check_branch
      %879 = sbr.rel (0) target = $region29
    $region28: #{complex_upsampling_bilinear2d.1} parent=1 // pred_region
      _
    $region29: #{complex_upsampling_bilinear2d.1} parent=1 // pred_fallthru
      _
    // Predicated region
    $region30: #{complex_upsampling_bilinear2d.1} parent=1 // pred_check
      _
    $region31: #{complex_upsampling_bilinear2d.1} parent=1 // pred_check_branch
      %881 = sbr.rel (0) target = $region33
    $region32: #{complex_upsampling_bilinear2d.1} parent=1 // pred_region
      _
    $region33: #{complex_upsampling_bilinear2d.1} parent=1 // pred_fallthru
      _
    %882 = vsyncpa [#allocation3], 1

</llo_original>
